<compile_context>
chip_gen: v5e
topology: v5e:2x2
jax: 0.10.0
libtpu: 0.0.40
codegen_flags: <defaults>
</compile_context>

<pallas_src>
import functools

import jax
import jax.numpy as jnp
from jax.experimental import pallas as pl
from jax.experimental.pallas import tpu as pltpu


_VMEM_BUDGET = 40 * 1024 * 1024  # keep well under v7x's 64 MiB physical VMEM


def _round_up(x, m):
    return (x + m - 1) // m * m


def _jacobi_thetas(k, a, b):
    t_k = (2 * k + a + b) * (2 * k + a + b - 1) / (2 * k * (k + a + b))
    t_k1 = ((2 * k + a + b - 1) * (a * a - b * b)
            / (2 * k * (k + a + b) * (2 * k + a + b - 2)))
    t_k2 = ((k + a - 1) * (k + b - 1) * (2 * k + a + b)
            / (k * (k + a + b) * (2 * k + a + b - 2)))
    return t_k, t_k1, t_k2


def _jacobikan_kernel(x_ref, c_ref, o_ref, slab_ref, *, degree, a, b, in_dim):
    # x_ref:    (tile_b, I)           input activations
    # c_ref:    ((D+1)*I, tile_o)     bf16 flattened Jacobi coefficients
    # o_ref:    (tile_b, tile_o)      f32 output tile
    # slab_ref: (tile_b, (D+1)*I)     f32 scratch holding [P_0 | P_1 | ... | P_D]
    I = in_dim

    # Build the polynomial slab once per batch tile (output-tile axis is inner
    # and marked "arbitrary", so j==0 always runs first for each batch tile).
    @pl.when(pl.program_id(1) == 0)
    def _build_slab():
        x = jnp.tanh(x_ref[...].astype(jnp.float32))
        p_km2 = jnp.ones_like(x)                       # P_0 = 1
        slab_ref[:, 0:I] = p_km2
        if degree > 0:
            p_km1 = (a - b + (a + b + 2.0) * x) * 0.5  # P_1
            slab_ref[:, I:2 * I] = p_km1
            p_prev2, p_prev1 = p_km2, p_km1
            for k in range(2, degree + 1):
                t_k, t_k1, t_k2 = _jacobi_thetas(k, a, b)
                p_k = (t_k * x + t_k1) * p_prev1 - t_k2 * p_prev2
                slab_ref[:, k * I:(k + 1) * I] = p_k
                p_prev2, p_prev1 = p_prev1, p_k

    # Single fused MXU matmul: K = (degree+1)*I, bf16 operands, f32 accumulate.
    o_ref[...] = jnp.dot(
        slab_ref[...].astype(jnp.bfloat16), c_ref[...],
        preferred_element_type=jnp.float32).astype(o_ref.dtype)


def _choose_tile_b(B, in_dim):
    # Cap batch tile to bound the slab scratch size / vreg pressure during
    # the recurrence; always keep it a multiple of 8 (sublane constraint).
    if in_dim >= 512:
        cap = 64
    elif in_dim >= 128:
        cap = 128
    else:
        cap = 256
    tile_b = min(cap, _round_up(B, 8))
    tile_b = max(8, _round_up(tile_b, 8))
    # Try to expose >= 2 steps on the parallel batch axis (megacore / 2 TCs),
    # but only when halving keeps the tile a multiple of 8.
    if (_round_up(B, tile_b) // tile_b) < 2 and tile_b >= 16 and tile_b % 16 == 0:
        tile_b //= 2
    return tile_b


def jacobikan_layer(x, coeffs_flat, *, in_dim, out_dim, degree, a=1.0, b=1.0):
    """One JacobiKANLayer forward.

    x:           (B, in_dim) float32
    coeffs_flat: ((degree+1)*in_dim, O_pad) bfloat16, O_pad = round_up(out_dim, 128)
                 row d*in_dim + i  ==  torch jacobi_coeffs[i, :, d]
    """
    B, I = x.shape
    assert I == in_dim
    K, O_pad = coeffs_flat.shape
    assert K == (degree + 1) * in_dim
    assert O_pad % 128 == 0 and O_pad >= out_dim

    # ---- batch tiling ---------------------------------------------------------
    tile_b = _choose_tile_b(B, in_dim)
    B_pad = _round_up(B, tile_b)

    # ---- output tiling under an explicit VMEM budget --------------------------
    def vmem_est(t_o):
        return (2 * tile_b * in_dim * x.dtype.itemsize   # x, double-buffered
                + 2 * K * t_o * 2                        # bf16 coeffs, double-buffered
                + 2 * tile_b * t_o * 4                   # output, double-buffered
                + tile_b * K * 4)                        # slab scratch (single)

    tile_o = 128
    for t in range(O_pad, 127, -128):
        if O_pad % t == 0 and vmem_est(t) <= _VMEM_BUDGET:
            tile_o = t
            break

    if B_pad != B:
        x = jnp.pad(x, ((0, B_pad - B), (0, 0)))

    kernel = functools.partial(_jacobikan_kernel, degree=degree,
                               a=float(a), b=float(b), in_dim=in_dim)

    grid = (B_pad // tile_b, O_pad // tile_o)
    cost = pl.CostEstimate(
        flops=2 * B_pad * K * O_pad,
        transcendentals=B_pad * in_dim,
        bytes_accessed=(B_pad * in_dim * x.dtype.itemsize
                        + K * O_pad * 2 + B_pad * O_pad * 4))
    vmem_limit = min(max(int(vmem_est(tile_o) * 1.5) + (4 << 20), 16 << 20),
                     100 << 20)

    out = pl.pallas_call(
        kernel,
        out_shape=jax.ShapeDtypeStruct((B_pad, O_pad), jnp.float32),
        grid_spec=pltpu.PrefetchScalarGridSpec(
            num_scalar_prefetch=0,
            grid=grid,
            in_specs=[
                pl.BlockSpec((tile_b, in_dim), lambda i, j: (i, 0)),
                pl.BlockSpec((K, tile_o), lambda i, j: (0, j)),
            ],
            out_specs=pl.BlockSpec((tile_b, tile_o), lambda i, j: (i, j)),
            scratch_shapes=[pltpu.VMEM((tile_b, K), jnp.float32)],
        ),
        compiler_params=pltpu.CompilerParams(
            dimension_semantics=("parallel", "arbitrary"),
            vmem_limit_bytes=vmem_limit),
        cost_estimate=cost,
    )(x, coeffs_flat)

    return out[:B, :out_dim]


def init_general_jacobikan_params(key, layer_dims, degree):
    """Matches nn.init.normal_(std=1/(in_dim*(degree+1))).

    Returns a list of (coeffs_flat_bf16, in_dim, out_dim) per layer, where
    coeffs_flat is the torch (I, O, D+1) tensor rearranged to ((D+1)*I, O_pad)
    and cast to bf16 (zero-padded on the output dim to a multiple of 128).
    """
    params = []
    for idx in range(len(layer_dims) - 1):
        key, sub = jax.random.split(key)
        in_dim, out_dim = layer_dims[idx], layer_dims[idx + 1]
        std = 1.0 / (in_dim * (degree + 1))
        c = std * jax.random.normal(sub, (in_dim, out_dim, degree + 1),
                                    dtype=jnp.float32)
        K = (degree + 1) * in_dim
        o_pad = _round_up(out_dim, 128)
        cf = jnp.transpose(c, (2, 0, 1)).reshape(K, out_dim)    # row = d*I + i
        cf = jnp.pad(cf, ((0, 0), (0, o_pad - out_dim)))
        params.append((cf.astype(jnp.bfloat16), in_dim, out_dim))
    return params


def general_jacobikan_forward(x, params, *, degree, a=1.0, b=1.0):
    # norm=False in the default module, so no LayerNorm layers.
    # TODO(synk): LayerNorm (norm=True path) not implemented — default is norm=False.
    h = jnp.reshape(x, (-1, params[0][1]))
    for coeffs_flat, in_dim, out_dim in params:
        h = jacobikan_layer(h, coeffs_flat, in_dim=in_dim, out_dim=out_dim,
                            degree=degree, a=a, b=b)
    return h


# --- pure-JAX reference (mirrors the torch forward with the same bf16 params)
def _ref_layer(x, coeffs_flat_bf16, in_dim, out_dim, degree, a, b):
    xt = jnp.tanh(x.astype(jnp.float32))
    polys = [jnp.ones_like(xt)]
    if degree > 0:
        polys.append((a - b + (a + b + 2.0) * xt) * 0.5)
    for k in range(2, degree + 1):
        t_k, t_k1, t_k2 = _jacobi_thetas(k, a, b)
        polys.append((t_k * xt + t_k1) * polys[-1] - t_k2 * polys[-2])
    slab = jnp.concatenate(polys, axis=-1)                     # (B, (D+1)*I)
    slab = slab.astype(jnp.bfloat16).astype(jnp.float32)       # mirror bf16 MXU feed
    c = coeffs_flat_bf16.astype(jnp.float32)
    return (slab @ c)[:, :out_dim]


def _ref_forward(x, params, degree, a, b):
    h = jnp.reshape(x, (-1, params[0][1]))
    for cf, in_dim, out_dim in params:
        h = _ref_layer(h, cf, in_dim, out_dim, degree, a, b)
    return h


if __name__ == "__main__":
    layer_dims = [32, 64, 16]
    degree = 4
    a, b = 1.0, 1.0
    batch = 8

    key = jax.random.PRNGKey(0)
    key, kx = jax.random.split(key)
    x = jax.random.normal(kx, (batch, layer_dims[0]), dtype=jnp.float32)
    params = init_general_jacobikan_params(key, layer_dims, degree)

    out = jax.block_until_ready(
        general_jacobikan_forward(x, params, degree=degree, a=a, b=b))
    ref = jax.block_until_ready(_ref_forward(x, params, degree, a, b))

    assert out.shape == (batch, layer_dims[-1])
    assert jnp.allclose(out, ref, rtol=2e-3, atol=2e-4), "mismatch vs reference"

    print("KERNEL_OK")
</pallas_src>

<mosaic_0001>
module attributes {stable_mosaic.version = 11 : i64} {
  func.func @_jacobikan_kernel(%arg0: i32, %arg1: i32, %arg2: memref<8x32xf32, #tpu.memory_space<vmem>>, %arg3: memref<160x128xbf16, #tpu.memory_space<vmem>>, %arg4: memref<8x128xf32, #tpu.memory_space<vmem>>, %arg5: memref<8x160xf32, #tpu.memory_space<vmem>>) attributes {dimension_semantics = [#tpu.dimension_semantics<parallel>, #tpu.dimension_semantics<arbitrary>], iteration_bounds = array<i64: 1, 1>, scalar_prefetch = 0 : i64, scratch_operands = 1 : i64, tpu.core_type = #tpu.core_type<tc>, window_params = [{transform_indices = @transform_0, window_bounds = array<i64: 8, 32>}, {transform_indices = @transform_1, window_bounds = array<i64: 160, 128>}, {transform_indices = @transform_2, window_bounds = array<i64: 8, 128>}]} {
    %c0_i32 = arith.constant 0 : i32
    %0 = arith.cmpi eq, %arg1, %c0_i32 : i32
    %1 = arith.extui %0 : i1 to i32
    %c0_i32_0 = arith.constant 0 : i32
    %2 = arith.cmpi ne, %1, %c0_i32_0 : i32
    scf.if %2 {
      %c0_6 = arith.constant 0 : index
      %c0_7 = arith.constant 0 : index
      %8 = vector.load %arg2[%c0_6, %c0_7] : memref<8x32xf32, #tpu.memory_space<vmem>>, vector<8x32xf32>
      %9 = math.tanh %8 : vector<8x32xf32>
      %cst_8 = arith.constant 1.000000e+00 : f32
      %10 = vector.broadcast %cst_8 : f32 to vector<8x32xf32>
      %c0_9 = arith.constant 0 : index
      %c0_10 = arith.constant 0 : index
      %11 = vector.load %arg5[%c0_9, %c0_10] : memref<8x160xf32, #tpu.memory_space<vmem>>, vector<8x32xf32>
      tpu.vector_store %arg5[%c0_9, %c0_10], %10 {strides = array<i32>} : memref<8x160xf32, #tpu.memory_space<vmem>>, vector<8x32xf32>,
      %cst_11 = arith.constant 4.000000e+00 : f32
      %12 = vector.broadcast %cst_11 : f32 to vector<8x32xf32>
      %13 = arith.mulf %12, %9 : vector<8x32xf32>
      %cst_12 = arith.constant 0.000000e+00 : f32
      %14 = vector.broadcast %cst_12 : f32 to vector<8x32xf32>
      %15 = arith.addf %14, %13 : vector<8x32xf32>
      %cst_13 = arith.constant 5.000000e-01 : f32
      %16 = vector.broadcast %cst_13 : f32 to vector<8x32xf32>
      %17 = arith.mulf %15, %16 : vector<8x32xf32>
      %c0_14 = arith.constant 0 : index
      %c32 = arith.constant 32 : index
      %18 = vector.load %arg5[%c0_14, %c32] : memref<8x160xf32, #tpu.memory_space<vmem>>, vector<8x32xf32>
      tpu.vector_store %arg5[%c0_14, %c32], %17 {strides = array<i32>} : memref<8x160xf32, #tpu.memory_space<vmem>>, vector<8x32xf32>,
      %cst_15 = arith.constant 1.875000e+00 : f32
      %19 = vector.broadcast %cst_15 : f32 to vector<8x32xf32>
      %20 = arith.mulf %19, %9 : vector<8x32xf32>
      %cst_16 = arith.constant 0.000000e+00 : f32
      %21 = vector.broadcast %cst_16 : f32 to vector<8x32xf32>
      %22 = arith.addf %20, %21 : vector<8x32xf32>
      %23 = arith.mulf %22, %17 : vector<8x32xf32>
      %cst_17 = arith.constant 7.500000e-01 : f32
      %24 = vector.broadcast %cst_17 : f32 to vector<8x32xf32>
      %25 = arith.mulf %24, %10 : vector<8x32xf32>
      %26 = arith.subf %23, %25 : vector<8x32xf32>
      %c0_18 = arith.constant 0 : index
      %c64 = arith.constant 64 : index
      %27 = vector.load %arg5[%c0_18, %c64] : memref<8x160xf32, #tpu.memory_space<vmem>>, vector<8x32xf32>
      tpu.vector_store %arg5[%c0_18, %c64], %26 {strides = array<i32>} : memref<8x160xf32, #tpu.memory_space<vmem>>, vector<8x32xf32>,
      %cst_19 = arith.constant 1.86666667 : f32
      %28 = vector.broadcast %cst_19 : f32 to vector<8x32xf32>
      %29 = arith.mulf %28, %9 : vector<8x32xf32>
      %cst_20 = arith.constant 0.000000e+00 : f32
      %30 = vector.broadcast %cst_20 : f32 to vector<8x32xf32>
      %31 = arith.addf %29, %30 : vector<8x32xf32>
      %32 = arith.mulf %31, %26 : vector<8x32xf32>
      %cst_21 = arith.constant 8.000000e-01 : f32
      %33 = vector.broadcast %cst_21 : f32 to vector<8x32xf32>
      %34 = arith.mulf %33, %17 : vector<8x32xf32>
      %35 = arith.subf %32, %34 : vector<8x32xf32>
      %c0_22 = arith.constant 0 : index
      %c96 = arith.constant 96 : index
      %36 = vector.load %arg5[%c0_22, %c96] : memref<8x160xf32, #tpu.memory_space<vmem>>, vector<8x32xf32>
      tpu.vector_store %arg5[%c0_22, %c96], %35 {strides = array<i32>} : memref<8x160xf32, #tpu.memory_space<vmem>>, vector<8x32xf32>,
      %cst_23 = arith.constant 1.875000e+00 : f32
      %37 = vector.broadcast %cst_23 : f32 to vector<8x32xf32>
      %38 = arith.mulf %37, %9 : vector<8x32xf32>
      %cst_24 = arith.constant 0.000000e+00 : f32
      %39 = vector.broadcast %cst_24 : f32 to vector<8x32xf32>
      %40 = arith.addf %38, %39 : vector<8x32xf32>
      %41 = arith.mulf %40, %35 : vector<8x32xf32>
      %cst_25 = arith.constant 0.833333313 : f32
      %42 = vector.broadcast %cst_25 : f32 to vector<8x32xf32>
      %43 = arith.mulf %42, %26 : vector<8x32xf32>
      %44 = arith.subf %41, %43 : vector<8x32xf32>
      %c0_26 = arith.constant 0 : index
      %c128 = arith.constant 128 : index
      %45 = vector.load %arg5[%c0_26, %c128] : memref<8x160xf32, #tpu.memory_space<vmem>>, vector<8x32xf32>
      tpu.vector_store %arg5[%c0_26, %c128], %44 {strides = array<i32>} : memref<8x160xf32, #tpu.memory_space<vmem>>, vector<8x32xf32>,
    } else {
    }
    %c0 = arith.constant 0 : index
    %c0_1 = arith.constant 0 : index
    %3 = vector.load %arg5[%c0, %c0_1] : memref<8x160xf32, #tpu.memory_space<vmem>>, vector<8x160xf32>
    %4 = arith.truncf %3 : vector<8x160xf32> to vector<8x160xbf16>
    %c0_2 = arith.constant 0 : index
    %c0_3 = arith.constant 0 : index
    %5 = vector.load %arg3[%c0_2, %c0_3] : memref<160x128xbf16, #tpu.memory_space<vmem>>, vector<160x128xbf16>
    %cst = arith.constant dense<0.000000e+00> : vector<8x128xf32>
    %6 = tpu.matmul %4, %5, %cst {dimension_numbers = #tpu.dot_dimension_numbers<[1], [0], [0], [1], [0, 0, 1, 1], [], []>} : vector<8x160xbf16>, vector<160x128xbf16>, vector<8x128xf32> -> vector<8x128xf32>
    %c0_4 = arith.constant 0 : index
    %c0_5 = arith.constant 0 : index
    %7 = vector.load %arg4[%c0_4, %c0_5] : memref<8x128xf32, #tpu.memory_space<vmem>>, vector<8x128xf32>
    tpu.vector_store %arg4[%c0_4, %c0_5], %6 {strides = array<i32>} : memref<8x128xf32, #tpu.memory_space<vmem>>, vector<8x128xf32>,
    return
  }
  func.func @transform_0(%arg0: i32, %arg1: i32) -> (i32, i32) {
    %c0_i32 = arith.constant 0 : i32
    %c0_i32_0 = arith.constant 0 : i32
    return %arg0, %c0_i32 : i32, i32
  }
  func.func @transform_1(%arg0: i32, %arg1: i32) -> (i32, i32) {
    %c0_i32 = arith.constant 0 : i32
    %c0_i32_0 = arith.constant 0 : i32
    return %c0_i32, %arg1 : i32, i32
  }
  func.func @transform_2(%arg0: i32, %arg1: i32) -> (i32, i32) {
    %c0_i32 = arith.constant 0 : i32
    return %arg0, %arg1 : i32, i32
  }
}

</mosaic_0001>

<llo_original>
// kernel: tpu_custom_call.1
$region0: #{tpu_custom_call.1}
  #allocation0 [shape = 'u32[]', space=smem, size = 0x4, offset = 0x4, fixed_abs, tag = 'smem constant byte address 0x4 - core index']
  #allocation1 [shape = 'u32[72,128]{1,0:T(1,128)}', space=vmem, size = 0x9000, scoped, tag = 'internal scratch']
  #allocation2 [shape = 'f32[8,160]{1,0:T(8,128)}', space=vmem, size = 0x2000, scoped, tag = 'scratch operand']
  %s0 = inlined_call_operand.hbm [shape: f32[8,32], index: 0, kind: input, shape index: {}]
  %s1 = inlined_call_operand.hbm [shape: bf16[160,128], index: 1, kind: input, shape index: {}]
  %s2 = inlined_call_operand.hbm [shape: f32[8,128], index: 2, kind: output, shape index: {}]
  %s3 = sld [smem:[#allocation0]]
  $region30: #{tpu_custom_call.1} parent=0
    _
  %s5 = ssub.s32 1, %s3
  %s6 = scalar_select 0, %s5, %s3
  $region1: #{tpu_custom_call.1} parent=0
    #allocation3 [shape = 'u8[4096]{0}', space=vmem, size = 0x1000, scoped, tag = 'input window, operand 0, single buffered']
    #allocation4 [shape = 's32[1]{0}', space=sflag, size = 0x4, scoped, tag = 'scoped memory for tpu_custom_call.1']
    #allocation5 [shape = 's32[1]{0}', space=sflag, size = 0x4, scoped, tag = 'scoped memory for tpu_custom_call.1']
    #allocation6 [shape = 'u8[40960]{0}', space=vmem, size = 0xa000, scoped, tag = 'input window, operand 1, single buffered']
    #allocation7 [shape = 's32[1]{0}', space=sflag, size = 0x4, scoped, tag = 'scoped memory for tpu_custom_call.1']
    #allocation8 [shape = 'u8[4096]{0}', space=vmem, size = 0x1000, scoped, tag = 'output window, operand 0, single buffered']
    %7 = vsyncpa [#allocation4], 0
    %8 = vsyncpa [#allocation7], 0
    %9 = vsyncpa [#allocation5], 0
    // Predicated region
    $region2: #{tpu_custom_call.1} parent=1 // pred_check
      _
    $region3: #{tpu_custom_call.1} parent=1 // pred_check_branch
      %11 = sbr.rel (0) target = $region5
    $region4: #{tpu_custom_call.1} parent=1 // pred_region
      %13 = vsyncadd [#allocation4], 0
      %s15 = sshll.u32 %s0, 4
      %s16 = int_to_ptr.hbm [resolvable:$true] %s15
      %s17 = sshll.u32 [#allocation3], 4
      %s18 = int_to_ptr.vmem [resolvable:$true] %s17
      %20 = dma.hbm_to_vmem [thread:$0]  %s16, 128, %s18, [#allocation4]
    $region5: #{tpu_custom_call.1} parent=1 // pred_fallthru
      _
    // Predicated region
    $region6: #{tpu_custom_call.1} parent=1 // pred_check
      _
    $region7: #{tpu_custom_call.1} parent=1 // pred_check_branch
      %22 = sbr.rel (0) target = $region9
    $region8: #{tpu_custom_call.1} parent=1 // pred_region
      %24 = vsyncadd [#allocation7], 0
      %s25 = sshll.u32 %s1, 4
      %s26 = int_to_ptr.hbm [resolvable:$true] %s25
      %s27 = sshll.u32 [#allocation6], 4
      %s28 = int_to_ptr.vmem [resolvable:$true] %s27
      %33 = dma.hbm_to_vmem [thread:$0]  %s26, 1280, %s28, [#allocation7], 64, 64, 4
    $region9: #{tpu_custom_call.1} parent=1 // pred_fallthru
      _
    // Predicated region
    $region10: #{tpu_custom_call.1} parent=1 // pred_check
      _
    $region11: #{tpu_custom_call.1} parent=1 // pred_check_branch
      %35 = sbr.rel (0) target = $region13
    $region12: #{tpu_custom_call.1} parent=1 // pred_region
      %37 = dma.done [#allocation4], 128
    $region13: #{tpu_custom_call.1} parent=1 // pred_fallthru
      _
    // Predicated region
    $region14: #{tpu_custom_call.1} parent=1 // pred_check
      _
    $region15: #{tpu_custom_call.1} parent=1 // pred_check_branch
      %39 = sbr.rel (0) target = $region17
    $region16: #{tpu_custom_call.1} parent=1 // pred_region
      %41 = dma.done [#allocation7], 1280
    $region17: #{tpu_custom_call.1} parent=1 // pred_fallthru
      _
    %p43 = scmp.eq.s32.totalorder 0, 0
    // Predicated region
    $region18: #{tpu_custom_call.1} parent=1 // pred_check
      %p44 = pneg %p43
    $region19: #{tpu_custom_call.1} parent=1 // pred_check_branch
      %46 = sbr.rel (%p44) target = $region21
    $region20: #{tpu_custom_call.1} parent=1 // pred_region
      %v47 = vld [vmem:[#allocation3] sm:$0xff]
      %v48 = vtanh.pop %v47
      %vm49 = vcmask 261120
      %50 = vst.msk [vmem:[#allocation2] sm:$0xff] %vm49, 1.0
      %v51 = vmul.f32 %v48, 4.0
      %v52 = vadd.f32 %v51, 0.0
      %v53 = vmul.f32 %v52, 0.5
      %55 = vrot.lane.b32.xlu0 %v53, 32
      %v56 = vpop.permute.xlu0 %55
      %vm58 = vcmask 523520
      %59 = vst.msk [vmem:[#allocation2] sm:$0xff] %vm58, %v56
      %v60 = vmul.f32 %v48, 1.875
      %v61 = vadd.f32 %v60, 0.0
      %v62 = vmul.f32 %v61, %v53
      %v63 = vsub.f32 %v62, 0.75
      %65 = vrot.lane.b32.xlu0 %v63, 64
      %v66 = vpop.permute.xlu0 %65
      %vm68 = vcmask 785920
      %69 = vst.msk [vmem:[#allocation2] sm:$0xff] %vm68, %v66
      %v70 = vmul.f32 %v48, 1.8666667
      %v71 = vadd.f32 %v70, 0.0
      %v72 = vmul.f32 %v71, %v63
      %v73 = vmul.f32 %v53, 0.8
      %v74 = vsub.f32 %v72, %v73
      %76 = vrot.lane.b32.xlu0 %v74, 96
      %v77 = vpop.permute.xlu0 %76
      %vm79 = vcmask 1048320
      %80 = vst.msk [vmem:[#allocation2] sm:$0xff] %vm79, %v77
      %v81 = vmul.f32 %v61, %v74
      %v82 = vmul.f32 %v63, 0.8333333
      %v83 = vsub.f32 %v81, %v82
      %84 = vst.msk [vmem:[#allocation2 + $0x8] sm:$0xff] %vm49, %v83
    $region21: #{tpu_custom_call.1} parent=1 // pred_fallthru
      _
    %v85 = vld [vmem:[#allocation2] sm:$0xff]
    %v86 = vld [vmem:[#allocation2 + $0x8] sm:$0xff]
    %v87 = vpack.c.bf16 %v85, %v85
    %v88 = vpack.c.bf16 %v86, %v86
    %v89 = vld [vmem:[#allocation6] sm:$0xf]
    %v90 = vld [vmem:[#allocation6 + $0x4] sm:$0xf]
    %v91 = vld [vmem:[#allocation6 + $0x8] sm:$0xf]
    %v92 = vld [vmem:[#allocation6 + $0xc] sm:$0xf]
    %v93 = vld [vmem:[#allocation6 + $0x10] sm:$0xf]
    %v94 = vld [vmem:[#allocation6 + $0x14] sm:$0xf]
    %v95 = vld [vmem:[#allocation6 + $0x18] sm:$0xf]
    %v96 = vld [vmem:[#allocation6 + $0x1c] sm:$0xf]
    %v97 = vld [vmem:[#allocation6 + $0x20] sm:$0xf]
    %v98 = vld [vmem:[#allocation6 + $0x24] sm:$0xf]
    %v99 = vld [vmem:[#allocation6 + $0x28] sm:$0xf]
    %v100 = vld [vmem:[#allocation6 + $0x2c] sm:$0xf]
    %v101 = vld [vmem:[#allocation6 + $0x30] sm:$0xf]
    %v102 = vld [vmem:[#allocation6 + $0x34] sm:$0xf]
    %v103 = vld [vmem:[#allocation6 + $0x38] sm:$0xf]
    %v104 = vld [vmem:[#allocation6 + $0x3c] sm:$0xf]
    %v105 = vld [vmem:[#allocation6 + $0x40] sm:$0xf]
    %v106 = vld [vmem:[#allocation6 + $0x44] sm:$0xf]
    %v107 = vld [vmem:[#allocation6 + $0x48] sm:$0xf]
    %v108 = vld [vmem:[#allocation6 + $0x4c] sm:$0xf]
    %v129 = vunpack.c.l.b16 %v89
    %v130 = vunpack.c.l.b16 %v90
    %v131 = vunpack.c.l.b16 %v91
    %v132 = vunpack.c.l.b16 %v92
    %v133 = vunpack.c.l.b16 %v93
    %v134 = vunpack.c.l.b16 %v94
    %v135 = vunpack.c.l.b16 %v95
    %v136 = vunpack.c.l.b16 %v96
    %v137 = vunpack.c.l.b16 %v97
    %v138 = vunpack.c.l.b16 %v98
    %v139 = vunpack.c.l.b16 %v99
    %v140 = vunpack.c.l.b16 %v100
    %v141 = vunpack.c.l.b16 %v101
    %v142 = vunpack.c.l.b16 %v102
    %v143 = vunpack.c.l.b16 %v103
    %v144 = vunpack.c.l.b16 %v104
    %v145 = vunpack.c.l.b16 %v105
    %v146 = vunpack.c.l.b16 %v106
    %v147 = vunpack.c.l.b16 %v107
    %v148 = vunpack.c.l.b16 %v108
    %v149 = vpack.c.b16 %v130, %v129
    %v150 = vpack.c.b16 %v132, %v131
    %v151 = vpack.c.b16 %v134, %v133
    %v152 = vpack.c.b16 %v136, %v135
    %v153 = vpack.c.b16 %v138, %v137
    %v154 = vpack.c.b16 %v140, %v139
    %v155 = vpack.c.b16 %v142, %v141
    %v156 = vpack.c.b16 %v144, %v143
    %v157 = vpack.c.b16 %v146, %v145
    %v158 = vpack.c.b16 %v148, %v147
    %vm169 = vcmask 261120
    %v171 = vsel %vm169, %v88, 0
    %173 = vmatpush.bf16.msra.mxu0 %v156
    %174 = vmatpush.bf16.msra.mxu0 %v155
    %175 = vmatpush.bf16.msra.mxu0 %v154
    %176 = vmatpush.bf16.msra.mxu0 %v153
    %177 = vmatpush.bf16.msra.mxu0 %v152
    %178 = vmatpush.bf16.msra.mxu0 %v151
    %179 = vmatpush.bf16.msra.mxu0 %v150
    %180 = vmatpush.bf16.msra.mxu0 %v149
    %181 = vmatmul.bf16.gmra.mxu0 %v87
    %v182 = vpop.f32.mrf.mxu0
    %v183 = vadd.f32 0.0, %v182
    %v184 = vpop.f32.mrf.mxu0
    %185 = vdwg.mxu0
    %186 = vmatpush.bf16.msra.mxu0 0
    %187 = vmatpush.bf16.msra.mxu0 0
    %188 = vmatpush.bf16.msra.mxu0 0
    %189 = vmatpush.bf16.msra.mxu0 0
    %190 = vmatpush.bf16.msra.mxu0 0
    %191 = vmatpush.bf16.msra.mxu0 0
    %192 = vmatpush.bf16.msra.mxu0 %v158
    %193 = vmatpush.bf16.msra.mxu0 %v157
    %194 = vmatmul.bf16.gmra.mxu0 %v171
    %v195 = vpop.f32.mrf.mxu0
    %v196 = vadd.f32 %v183, %v195
    %v197 = vpop.f32.mrf.mxu0
    %198 = vdwg.mxu0
    %199 = vst [vmem:[#allocation8] sm:$0xff] %v196
    // Predicated region
    $region22: #{tpu_custom_call.1} parent=1 // pred_check
      _
    $region23: #{tpu_custom_call.1} parent=1 // pred_check_branch
      %201 = sbr.rel (0) target = $region25
    $region24: #{tpu_custom_call.1} parent=1 // pred_region
      %203 = vsyncadd [#allocation5], 0
      %s205 = sshll.u32 [#allocation8], 4
      %s206 = int_to_ptr.vmem [resolvable:$true] %s205
      %s207 = sshll.u32 %s2, 4
      %s208 = int_to_ptr.hbm [resolvable:$true] %s207
      %210 = dma.vmem_to_hbm [thread:$0]  %s206, 128, %s208, [#allocation5]
    $region25: #{tpu_custom_call.1} parent=1 // pred_fallthru
      _
    // Predicated region
    $region26: #{tpu_custom_call.1} parent=1 // pred_check
      _
    $region27: #{tpu_custom_call.1} parent=1 // pred_check_branch
      %212 = sbr.rel (0) target = $region29
    $region28: #{tpu_custom_call.1} parent=1 // pred_region
      %214 = dma.done [#allocation5], 128
    $region29: #{tpu_custom_call.1} parent=1 // pred_fallthru
      _
    %215 = vsyncpa [#allocation4], 1
    %216 = vsyncpa [#allocation7], 1
    %217 = vsyncpa [#allocation5], 1

</llo_original>
